<compile_context>
chip_gen: v7x
topology: tpu7x:2x2x1
jax: 0.10.0
libtpu: 0.0.40
codegen_flags: <defaults>
</compile_context>

<pallas_src>
import functools
import math

import numpy as np
import jax
import jax.numpy as jnp
from jax.experimental import pallas as pl
from jax.experimental.pallas import tpu as pltpu


def _padding(i, o, k, s=1, d=1, mode='same'):
    if mode == 'same':
        return ((o - 1) * s + (k - 1) * (d - 1) + k - i) // 2
    raise RuntimeError('Not implemented')


# ---------------------------------------------------------------------------
# Kernel
# ---------------------------------------------------------------------------
def _row_lstm_kernel(x_ref, h_ref, w_ref, b_ref, c_ref, h_out_ref, c_out_ref,
                     *, width, hidden, channels, hidden_g):
    """One lane-dense batch block per grid step (batch folded into lanes).

    x_ref : (C, BWt)   bf16  input row, channel-major
    h_ref : (H, BWt)   bf16  previous hidden row
    w_ref : (4Hg, K)   bf16  fused conv weights, K = 2C + 3H, gate rows padded
    b_ref : (4Hg, 1)   f32   b_is + b_ss (padded gate rows are zero)
    c_ref : (H, BWt)   f32   previous cell state
    outs  : (H, BWt)   f32   new hidden / new cell state
    """
    W, H, C, Hg = width, hidden, channels, hidden_g

    # Upcast to f32 for the shift/select slab build (lossless; MXU operands
    # are re-cast to bf16 just before the dot).
    x = x_ref[...].astype(jnp.float32)            # (C, BWt)
    h = h_ref[...].astype(jnp.float32)            # (H, BWt)
    bw = x.shape[1]

    # Position of each lane inside its width-W image segment.  BWt is a
    # multiple of W (whole batch elements per block), so segments never
    # straddle a block and only the segment-edge lane of each rolled slab
    # needs masking — this realises the 'same' zero padding.
    wpos_x = jax.lax.broadcasted_iota(jnp.int32, (C, bw), 1) % W
    wpos_h = jax.lax.broadcasted_iota(jnp.int32, (H, bw), 1) % W

    x_m = jnp.where(wpos_x == 0, 0.0, pltpu.roll(x, shift=1, axis=1))           # x[w-1]
    h_m = jnp.where(wpos_h == 0, 0.0, pltpu.roll(h, shift=1, axis=1))           # h[w-1]
    h_p = jnp.where(wpos_h == W - 1, 0.0, pltpu.roll(h, shift=bw - 1, axis=1))  # h[w+1]

    # Fused im2col slab built as a value (no VMEM scratch round trip).
    # Row order must match pack_row_lstm_weights.  conv_i_s' x[w+1] tap is
    # intentionally absent: the MaskedConv1d 'B' mask zeroes it.
    rhs = jnp.concatenate([x, x_m, h, h_m, h_p], axis=0).astype(jnp.bfloat16)

    # Single MXU matmul: both convs, all kept taps, all four gates.
    gates = jnp.dot(w_ref[...], rhs, preferred_element_type=jnp.float32)  # (4Hg, BWt)
    lstm = jax.nn.sigmoid(gates + b_ref[...])    # torch applies sigmoid to ALL gates

    i_g = lstm[0 * Hg:0 * Hg + H, :]             # gate slices start tile-aligned
    g_g = lstm[1 * Hg:1 * Hg + H, :]
    f_g = lstm[2 * Hg:2 * Hg + H, :]
    o_g = lstm[3 * Hg:3 * Hg + H, :]

    c_new = f_g * c_ref[...] + i_g * g_g
    h_out_ref[...] = (o_g * jnp.tanh(c_new)).astype(h_out_ref.dtype)
    c_out_ref[...] = c_new.astype(c_out_ref.dtype)


# ---------------------------------------------------------------------------
# Weight packing (hoisted: once per model, NOT per row step)
# ---------------------------------------------------------------------------
def make_row_lstm_params(key, hidden_dims, channel_in):
    """Deterministic synthetic parameters with the torch module's shapes."""
    F4 = 4 * hidden_dims
    k1, k2, k3, k4 = jax.random.split(key, 4)
    return dict(
        w_is=0.1 * jax.random.normal(k1, (F4, hidden_dims, 3), jnp.float32),
        b_is=0.1 * jax.random.normal(k2, (F4,), jnp.float32),
        w_ss=0.1 * jax.random.normal(k3, (F4, channel_in, 3), jnp.float32),
        b_ss=0.1 * jax.random.normal(k4, (F4,), jnp.float32),
    )


def _gate_pad(a, H, Hg):
    """Pad per-gate rows from H to Hg along the leading (4*H) axis."""
    if Hg == H:
        return a
    shp = a.shape
    a = a.reshape((4, H) + shp[1:])
    pad = [(0, 0), (0, Hg - H)] + [(0, 0)] * (len(shp) - 1)
    return jnp.pad(a, pad).reshape((4 * Hg,) + shp[1:])


def pack_row_lstm_weights(params, *, hidden_dims, channel_in, image_size):
    """Fuse both convs' kept taps into one (4*Hg, K) bf16 matrix, K = 2C + 3H,
    and fold the two biases.  The 'B' mask of conv_i_s zeroes its x[w+1] tap,
    so that tap is dropped here; mask application and tap-drop stay coupled."""
    H, C = hidden_dims, channel_in
    if C != H:
        raise ValueError("RowLSTMCell.forward requires channel_in == hidden_dims")
    assert _padding(image_size, image_size, 3) == 1      # 'same' padding for k=3
    Hg = -(-H // 8) * 8                                  # gate rows -> sublane multiple
    mask = jnp.array([1.0, 1.0, 0.0], jnp.float32)       # MaskedConv1d('B'), k=3
    w_is_m = params['w_is'] * mask[None, None, :]        # (4H, H, 3) applied to x
    w_ss = params['w_ss']                                # (4H, C, 3) applied to h
    # Column order must match the kernel's RHS: x[w], x[w-1], h[w], h[w-1], h[w+1]
    w_big = jnp.concatenate(
        [w_is_m[:, :, 1], w_is_m[:, :, 0],
         w_ss[:, :, 1], w_ss[:, :, 0], w_ss[:, :, 2]], axis=1)        # (4H, K)
    bias = (params['b_is'] + params['b_ss']).astype(jnp.float32)      # (4H,)
    w_big = _gate_pad(w_big, H, Hg).astype(jnp.bfloat16)              # (4Hg, K)
    bias = _gate_pad(bias, H, Hg).reshape(4 * Hg, 1)                  # (4Hg, 1) f32
    return {'w': w_big, 'b': bias}


# ---------------------------------------------------------------------------
# Tiling & wrappers
# ---------------------------------------------------------------------------
def _choose_tiling(batch, width, lane_align=256, target_lanes=512):
    """Pick (padded batch, batch per grid step, #grid steps).

    Blocks hold whole batch elements (image-row segments never straddle a
    block), block lane width is a multiple of `lane_align` (lane-dense stores,
    fills the 256-wide MXU on v6e/v7x) and targets `target_lanes` per step,
    while keeping >=2 grid steps when the batch allows (v7x megacore)."""
    g = math.gcd(width, lane_align)
    bt_unit = lane_align // g                       # batch elems per aligned unit
    n_units = pl.cdiv(batch, bt_unit)
    if n_units >= 2:
        units_per_step = max(1, min(target_lanes // (bt_unit * width),
                                    n_units // 2))
    else:
        units_per_step = 1
    n_steps = pl.cdiv(n_units, units_per_step)
    batch_pad = n_steps * units_per_step * bt_unit
    return batch_pad, units_per_step * bt_unit, n_steps


def _row_lstm_cm(x_cm, h_cm, c_cm, packed, *, width, hidden, channels,
                 block_lanes, n_steps):
    """Channel-major core: x_cm (C, BWp) bf16, h_cm (H, BWp) bf16,
    c_cm (H, BWp) f32, with BWp = n_steps * block_lanes.  Returns
    (h_new, c_new), both (H, BWp) f32.  A fused row-scan should call this
    layout (or fuse further) and never leave channel-major between rows."""
    H, C = hidden, channels
    assert block_lanes % width == 0
    w_big, bias = packed['w'], packed['b']
    Hg4, K = w_big.shape
    Hg = Hg4 // 4

    kernel = functools.partial(_row_lstm_kernel, width=width, hidden=H,
                               channels=C, hidden_g=Hg)
    return pl.pallas_call(
        kernel,
        grid=(n_steps,),
        in_specs=[
            pl.BlockSpec((C, block_lanes), lambda i: (0, i)),   # x (bf16)
            pl.BlockSpec((H, block_lanes), lambda i: (0, i)),   # h_prev (bf16)
            pl.BlockSpec((Hg4, K), lambda i: (0, 0)),           # fused weights (resident)
            pl.BlockSpec((Hg4, 1), lambda i: (0, 0)),           # bias (resident)
            pl.BlockSpec((H, block_lanes), lambda i: (0, i)),   # c_prev (f32)
        ],
        out_specs=(
            pl.BlockSpec((H, block_lanes), lambda i: (0, i)),
            pl.BlockSpec((H, block_lanes), lambda i: (0, i)),
        ),
        out_shape=(
            jax.ShapeDtypeStruct((H, n_steps * block_lanes), jnp.float32),
            jax.ShapeDtypeStruct((H, n_steps * block_lanes), jnp.float32),
        ),
        compiler_params=pltpu.CompilerParams(
            dimension_semantics=("parallel",)),   # batch blocks shard across TCs
    )(x_cm, h_cm, w_big, bias, c_cm)


def row_lstm_cell_forward(inputs, states, packed, *, hidden_dims, image_size,
                          channel_in, lane_align=256, target_lanes=512):
    """Mirrors RowLSTMCell.forward: returns (h, (c, h)) with flat (B, H*W) states."""
    # TODO(synk): for the full PixelRNN, fuse the scan over image rows into one
    # pallas_call (grid=(rows, batch_blocks), row axis "arbitrary", h/c carried
    # in VMEM or via input_output_aliases) so these layout transposes and the
    # weight fetch are amortized over the whole image instead of per row.
    c_prev, h_prev = states
    H, W, C = hidden_dims, image_size, channel_in
    if C != H:
        raise ValueError("RowLSTMCell.forward requires channel_in == hidden_dims")
    B = inputs.shape[0]

    B_pad, bt, n_steps = _choose_tiling(B, W, lane_align, target_lanes)

    def to_cm(a, ch, dtype):
        a = a.reshape(B, ch, W)
        if B_pad != B:                             # pad batch -> lane-dense blocks
            a = jnp.pad(a, ((0, B_pad - B), (0, 0), (0, 0)))
        return jnp.transpose(a, (1, 0, 2)).reshape(ch, B_pad * W).astype(dtype)

    x_cm = to_cm(inputs, C, jnp.bfloat16)          # MXU operands bf16, f32 accum
    h_cm = to_cm(h_prev, H, jnp.bfloat16)
    c_cm = to_cm(c_prev, H, jnp.float32)

    h2, c2 = _row_lstm_cm(x_cm, h_cm, c_cm, packed, width=W, hidden=H,
                          channels=C, block_lanes=bt * W, n_steps=n_steps)

    def from_cm(a):                                # back to torch (B, H*W) layout
        a = a.reshape(H, B_pad, W)[:, :B]
        return jnp.transpose(a, (1, 0, 2)).reshape(B, H * W)

    h_flat = from_cm(h2)
    c_flat = from_cm(c2)
    return h_flat, (c_flat, h_flat)


# ---------------------------------------------------------------------------
# Pure-JAX reference (lax conv; same bf16 operand cast as the kernel)
# ---------------------------------------------------------------------------
def _reference(inputs, c_prev, h_prev, w_is_masked, b_is, w_ss, b_ss, H, W, C):
    B = inputs.shape[0]
    x = inputs.reshape(B, C, W).astype(jnp.bfloat16)
    h = h_prev.reshape(B, H, W).astype(jnp.bfloat16)
    dn = ('NCH', 'OIH', 'NCH')
    pad = _padding(W, W, 3)
    i_s = jax.lax.conv_general_dilated(
        x, w_is_masked.astype(jnp.bfloat16), (1,), ((pad, pad),),
        dimension_numbers=dn, preferred_element_type=jnp.float32
    ) + b_is[None, :, None]
    s_s = jax.lax.conv_general_dilated(
        h, w_ss.astype(jnp.bfloat16), (1,), ((pad, pad),),
        dimension_numbers=dn, preferred_element_type=jnp.float32
    ) + b_ss[None, :, None]
    lstm = jax.nn.sigmoid((s_s + i_s).reshape(B, 4 * H * W))
    nu = H * W
    i_g, g_g = lstm[:, 0:nu], lstm[:, nu:2 * nu]
    f_g, o_g = lstm[:, 2 * nu:3 * nu], lstm[:, 3 * nu:4 * nu]
    c = f_g * c_prev + i_g * g_g
    hh = o_g * jnp.tanh(c)
    return hh, c


if __name__ == "__main__":
    hidden_dims, image_size, channel_in, batch = 4, 16, 4, 2
    num_units = hidden_dims * image_size

    key = jax.random.PRNGKey(0)
    k_in, k_c, k_h, k_p = jax.random.split(key, 4)
    inputs = jax.random.normal(k_in, (batch, channel_in * image_size), jnp.float32)
    c_prev = jax.random.normal(k_c, (batch, num_units), jnp.float32)
    h_prev = jax.random.normal(k_h, (batch, num_units), jnp.float32)
    params = make_row_lstm_params(k_p, hidden_dims, channel_in)
    packed = pack_row_lstm_weights(params, hidden_dims=hidden_dims,
                                   channel_in=channel_in, image_size=image_size)

    h_out, (c_out, h_out2) = row_lstm_cell_forward(
        inputs, (c_prev, h_prev), packed,
        hidden_dims=hidden_dims, image_size=image_size, channel_in=channel_in)
    jax.block_until_ready((h_out, c_out))

    # correctness check against a pure-JAX conv reference (same bf16 operand cast)
    mask = jnp.array([1.0, 1.0, 0.0], jnp.float32)
    h_ref, c_ref = _reference(
        inputs, c_prev, h_prev,
        params['w_is'] * mask[None, None, :], params['b_is'],
        params['w_ss'], params['b_ss'],
        hidden_dims, image_size, channel_in)
    assert np.allclose(np.asarray(h_out), np.asarray(h_ref), atol=1e-3, rtol=1e-3)
    assert np.allclose(np.asarray(c_out), np.asarray(c_ref), atol=1e-3, rtol=1e-3)
    print("KERNEL_OK")
</pallas_src>

<mosaic_0001>
module attributes {stable_mosaic.version = 11 : i64} {
  func.func @_row_lstm_kernel(%arg0: i32, %arg1: memref<4x256xbf16, #tpu.memory_space<vmem>>, %arg2: memref<4x256xbf16, #tpu.memory_space<vmem>>, %arg3: memref<32x20xbf16, #tpu.memory_space<vmem>>, %arg4: memref<32x1xf32, #tpu.memory_space<vmem>>, %arg5: memref<4x256xf32, #tpu.memory_space<vmem>>, %arg6: memref<4x256xf32, #tpu.memory_space<vmem>>, %arg7: memref<4x256xf32, #tpu.memory_space<vmem>>) attributes {dimension_semantics = [#tpu.dimension_semantics<parallel>], iteration_bounds = array<i64: 1>, scalar_prefetch = 0 : i64, scratch_operands = 0 : i64, tpu.core_type = #tpu.core_type<tc>, window_params = [{transform_indices = @transform_0, window_bounds = array<i64: 4, 256>}, {transform_indices = @transform_1, window_bounds = array<i64: 4, 256>}, {pipeline_mode = #tpu.pipeline_mode<synchronous>, transform_indices = @transform_2, window_bounds = array<i64: 32, 20>}, {pipeline_mode = #tpu.pipeline_mode<synchronous>, transform_indices = @transform_3, window_bounds = array<i64: 32, 1>}, {transform_indices = @transform_4, window_bounds = array<i64: 4, 256>}, {transform_indices = @transform_5, window_bounds = array<i64: 4, 256>}, {transform_indices = @transform_6, window_bounds = array<i64: 4, 256>}]} {
    %c0 = arith.constant 0 : index
    %c0_0 = arith.constant 0 : index
    %0 = vector.load %arg1[%c0, %c0_0] : memref<4x256xbf16, #tpu.memory_space<vmem>>, vector<4x256xbf16>
    %1 = arith.extf %0 : vector<4x256xbf16> to vector<4x256xf32>
    %c0_1 = arith.constant 0 : index
    %c0_2 = arith.constant 0 : index
    %2 = vector.load %arg2[%c0_1, %c0_2] : memref<4x256xbf16, #tpu.memory_space<vmem>>, vector<4x256xbf16>
    %3 = arith.extf %2 : vector<4x256xbf16> to vector<4x256xf32>
    %4 = tpu.iota {dimensions = array<i32: 1>} : vector<4x256xi32>
    %c16_i32 = arith.constant 16 : i32
    %c0_i32 = arith.constant 0 : i32
    %5 = arith.cmpi eq, %c16_i32, %c0_i32 : i32
    %c1_i32 = arith.constant 1 : i32
    %6 = arith.select %5, %c1_i32, %c16_i32 : i32
    %7 = vector.broadcast %6 : i32 to vector<4x256xi32>
    %8 = arith.remsi %4, %7 : vector<4x256xi32>
    %c0_i32_3 = arith.constant 0 : i32
    %9 = vector.broadcast %c0_i32_3 : i32 to vector<4x256xi32>
    %10 = arith.cmpi ne, %8, %9 : vector<4x256xi32>
    %c0_i32_4 = arith.constant 0 : i32
    %11 = vector.broadcast %c0_i32_4 : i32 to vector<4x256xi32>
    %12 = arith.cmpi slt, %8, %11 : vector<4x256xi32>
    %c0_i32_5 = arith.constant 0 : i32
    %13 = arith.cmpi slt, %6, %c0_i32_5 : i32
    %14 = vector.broadcast %13 : i1 to vector<4x256xi1>
    %15 = vector.broadcast %14 : vector<4x256xi1> to vector<4x256xi1>
    %16 = arith.xori %12, %15 : vector<4x256xi1>
    %17 = arith.andi %16, %10 : vector<4x256xi1>
    %18 = vector.broadcast %6 : i32 to vector<4x256xi32>
    %19 = arith.addi %8, %18 : vector<4x256xi32>
    %20 = arith.select %17, %19, %8 : vector<4x256xi1>, vector<4x256xi32>
    %21 = tpu.iota {dimensions = array<i32: 1>} : vector<4x256xi32>
    %c16_i32_6 = arith.constant 16 : i32
    %c0_i32_7 = arith.constant 0 : i32
    %22 = arith.cmpi eq, %c16_i32_6, %c0_i32_7 : i32
    %c1_i32_8 = arith.constant 1 : i32
    %23 = arith.select %22, %c1_i32_8, %c16_i32_6 : i32
    %24 = vector.broadcast %23 : i32 to vector<4x256xi32>
    %25 = arith.remsi %21, %24 : vector<4x256xi32>
    %c0_i32_9 = arith.constant 0 : i32
    %26 = vector.broadcast %c0_i32_9 : i32 to vector<4x256xi32>
    %27 = arith.cmpi ne, %25, %26 : vector<4x256xi32>
    %c0_i32_10 = arith.constant 0 : i32
    %28 = vector.broadcast %c0_i32_10 : i32 to vector<4x256xi32>
    %29 = arith.cmpi slt, %25, %28 : vector<4x256xi32>
    %c0_i32_11 = arith.constant 0 : i32
    %30 = arith.cmpi slt, %23, %c0_i32_11 : i32
    %31 = vector.broadcast %30 : i1 to vector<4x256xi1>
    %32 = vector.broadcast %31 : vector<4x256xi1> to vector<4x256xi1>
    %33 = arith.xori %29, %32 : vector<4x256xi1>
    %34 = arith.andi %33, %27 : vector<4x256xi1>
    %35 = vector.broadcast %23 : i32 to vector<4x256xi32>
    %36 = arith.addi %25, %35 : vector<4x256xi32>
    %37 = arith.select %34, %36, %25 : vector<4x256xi1>, vector<4x256xi32>
    %c0_i32_12 = arith.constant 0 : i32
    %38 = vector.broadcast %c0_i32_12 : i32 to vector<4x256xi32>
    %39 = arith.cmpi eq, %20, %38 : vector<4x256xi32>
    %c1_i32_13 = arith.constant 1 : i32
    %40 = tpu.dynamic_rotate %1 by %c1_i32_13 dim 1 : vector<4x256xf32>, i32 -> vector<4x256xf32>
    %cst = arith.constant 0.000000e+00 : f32
    %41 = vector.broadcast %cst : f32 to vector<4x256xf32>
    %42 = arith.select %39, %41, %40 : vector<4x256xi1>, vector<4x256xf32>
    %c0_i32_14 = arith.constant 0 : i32
    %43 = vector.broadcast %c0_i32_14 : i32 to vector<4x256xi32>
    %44 = arith.cmpi eq, %37, %43 : vector<4x256xi32>
    %c1_i32_15 = arith.constant 1 : i32
    %45 = tpu.dynamic_rotate %3 by %c1_i32_15 dim 1 : vector<4x256xf32>, i32 -> vector<4x256xf32>
    %cst_16 = arith.constant 0.000000e+00 : f32
    %46 = vector.broadcast %cst_16 : f32 to vector<4x256xf32>
    %47 = arith.select %44, %46, %45 : vector<4x256xi1>, vector<4x256xf32>
    %c15_i32 = arith.constant 15 : i32
    %48 = vector.broadcast %c15_i32 : i32 to vector<4x256xi32>
    %49 = arith.cmpi eq, %37, %48 : vector<4x256xi32>
    %c255_i32 = arith.constant 255 : i32
    %50 = tpu.dynamic_rotate %3 by %c255_i32 dim 1 : vector<4x256xf32>, i32 -> vector<4x256xf32>
    %cst_17 = arith.constant 0.000000e+00 : f32
    %51 = vector.broadcast %cst_17 : f32 to vector<4x256xf32>
    %52 = arith.select %49, %51, %50 : vector<4x256xi1>, vector<4x256xf32>
    %53 = tpu.concatenate %1, %42, %3, %47, %52 in 0 : vector<4x256xf32>, vector<4x256xf32>, vector<4x256xf32>, vector<4x256xf32>, vector<4x256xf32> -> vector<20x256xf32>
    %54 = arith.truncf %53 : vector<20x256xf32> to vector<20x256xbf16>
    %c0_18 = arith.constant 0 : index
    %c0_19 = arith.constant 0 : index
    %55 = vector.load %arg3[%c0_18, %c0_19] : memref<32x20xbf16, #tpu.memory_space<vmem>>, vector<32x20xbf16>
    %cst_20 = arith.constant dense<0.000000e+00> : vector<32x256xf32>
    %56 = tpu.matmul %55, %54, %cst_20 {dimension_numbers = #tpu.dot_dimension_numbers<[1], [0], [0], [1], [0, 0, 1, 1], [], []>} : vector<32x20xbf16>, vector<20x256xbf16>, vector<32x256xf32> -> vector<32x256xf32>
    %c0_21 = arith.constant 0 : index
    %c0_22 = arith.constant 0 : index
    %57 = vector.load %arg4[%c0_21, %c0_22] : memref<32x1xf32, #tpu.memory_space<vmem>>, vector<32x1xf32>
    %58 = vector.broadcast %57 : vector<32x1xf32> to vector<32x256xf32>
    %59 = arith.addf %56, %58 : vector<32x256xf32>
    %60 = arith.negf %59 : vector<32x256xf32>
    %61 = math.exp %60 : vector<32x256xf32>
    %cst_23 = arith.constant 1.000000e+00 : f32
    %62 = vector.broadcast %cst_23 : f32 to vector<32x256xf32>
    %63 = arith.addf %62, %61 : vector<32x256xf32>
    %64 = arith.divf %62, %63 : vector<32x256xf32>
    %65 = vector.extract_strided_slice %64 {offsets = [0, 0], sizes = [4, 256], strides = [1, 1]} : vector<32x256xf32> to vector<4x256xf32>
    %66 = vector.extract_strided_slice %64 {offsets = [8, 0], sizes = [4, 256], strides = [1, 1]} : vector<32x256xf32> to vector<4x256xf32>
    %67 = vector.extract_strided_slice %64 {offsets = [16, 0], sizes = [4, 256], strides = [1, 1]} : vector<32x256xf32> to vector<4x256xf32>
    %68 = vector.extract_strided_slice %64 {offsets = [24, 0], sizes = [4, 256], strides = [1, 1]} : vector<32x256xf32> to vector<4x256xf32>
    %c0_24 = arith.constant 0 : index
    %c0_25 = arith.constant 0 : index
    %69 = vector.load %arg5[%c0_24, %c0_25] : memref<4x256xf32, #tpu.memory_space<vmem>>, vector<4x256xf32>
    %70 = arith.mulf %67, %69 : vector<4x256xf32>
    %71 = arith.mulf %65, %66 : vector<4x256xf32>
    %72 = arith.addf %70, %71 : vector<4x256xf32>
    %73 = math.tanh %72 : vector<4x256xf32>
    %74 = arith.mulf %68, %73 : vector<4x256xf32>
    %c0_26 = arith.constant 0 : index
    %c0_27 = arith.constant 0 : index
    %75 = vector.load %arg6[%c0_26, %c0_27] : memref<4x256xf32, #tpu.memory_space<vmem>>, vector<4x256xf32>
    tpu.vector_store %arg6[%c0_26, %c0_27], %74 {strides = array<i32>} : memref<4x256xf32, #tpu.memory_space<vmem>>, vector<4x256xf32>,
    %c0_28 = arith.constant 0 : index
    %c0_29 = arith.constant 0 : index
    %76 = vector.load %arg7[%c0_28, %c0_29] : memref<4x256xf32, #tpu.memory_space<vmem>>, vector<4x256xf32>
    tpu.vector_store %arg7[%c0_28, %c0_29], %72 {strides = array<i32>} : memref<4x256xf32, #tpu.memory_space<vmem>>, vector<4x256xf32>,
    return
  }
  func.func @transform_0(%arg0: i32) -> (i32, i32) {
    %c0_i32 = arith.constant 0 : i32
    %c0_i32_0 = arith.constant 0 : i32
    return %c0_i32, %arg0 : i32, i32
  }
  func.func @transform_1(%arg0: i32) -> (i32, i32) {
    %c0_i32 = arith.constant 0 : i32
    %c0_i32_0 = arith.constant 0 : i32
    return %c0_i32, %arg0 : i32, i32
  }
  func.func @transform_2(%arg0: i32) -> (i32, i32) {
    %c0_i32 = arith.constant 0 : i32
    %c0_i32_0 = arith.constant 0 : i32
    %c0_i32_1 = arith.constant 0 : i32
    return %c0_i32, %c0_i32_0 : i32, i32
  }
  func.func @transform_3(%arg0: i32) -> (i32, i32) {
    %c0_i32 = arith.constant 0 : i32
    %c0_i32_0 = arith.constant 0 : i32
    %c0_i32_1 = arith.constant 0 : i32
    return %c0_i32, %c0_i32_0 : i32, i32
  }
  func.func @transform_4(%arg0: i32) -> (i32, i32) {
    %c0_i32 = arith.constant 0 : i32
    %c0_i32_0 = arith.constant 0 : i32
    return %c0_i32, %arg0 : i32, i32
  }
  func.func @transform_5(%arg0: i32) -> (i32, i32) {
    %c0_i32 = arith.constant 0 : i32
    %c0_i32_0 = arith.constant 0 : i32
    return %c0_i32, %arg0 : i32, i32
  }
  func.func @transform_6(%arg0: i32) -> (i32, i32) {
    %c0_i32 = arith.constant 0 : i32
    %c0_i32_0 = arith.constant 0 : i32
    return %c0_i32, %arg0 : i32, i32
  }
}

</mosaic_0001>

<llo_original>
// kernel: tpu_custom_call.1
$region0: #{tpu_custom_call.1}
  #allocation0 [shape = 'u32[]', space=smem, size = 0x4, offset = 0x4, fixed_abs, tag = 'smem constant byte address 0x4 - core index']
  #allocation1 [shape = 'u32[144,128]{1,0:T(1,128)}', space=vmem, size = 0x12000, scoped, tag = 'internal scratch']
  %s0 = inlined_call_operand.vmem [shape: bf16[4,256], index: 0, kind: input, shape index: {}]
  %s1 = inlined_call_operand.vmem [shape: bf16[4,256], index: 1, kind: input, shape index: {}]
  %s2 = inlined_call_operand.vmem [shape: bf16[32,20], index: 2, kind: input, shape index: {}]
  %s3 = inlined_call_operand.vmem [shape: f32[32,1], index: 3, kind: input, shape index: {}]
  %s4 = inlined_call_operand.vmem [shape: f32[4,256], index: 4, kind: input, shape index: {}]
  %s5 = inlined_call_operand.hbm [shape: f32[4,256], index: 5, kind: output, shape index: {0}]
  %s6 = inlined_call_operand.hbm [shape: f32[4,256], index: 6, kind: output, shape index: {1}]
  %7 = xla_tuple %s5, %s6
  %s8 = sld [smem:[#allocation0]]
  $region38: #{tpu_custom_call.1} parent=0
    _
  %s10 = ssub.s32 1, %s8
  %s11 = scalar_select 0, %s10, %s8
  $region1: #{tpu_custom_call.1} parent=0
    #allocation2 [shape = 'u8[4096]{0}', space=vmem, size = 0x1000, scoped, tag = 'output window, operand 0, single buffered']
    #allocation3 [shape = 's32[1]{0}', space=sflag, size = 0x4, scoped, tag = 'scoped memory for tpu_custom_call.1']
    #allocation4 [shape = 'u8[4096]{0}', space=vmem, size = 0x1000, scoped, tag = 'output window, operand 1, single buffered']
    #allocation5 [shape = 's32[1]{0}', space=sflag, size = 0x4, scoped, tag = 'scoped memory for tpu_custom_call.1']
    %12 = vsyncpa [#allocation3], 0
    %13 = vsyncpa [#allocation5], 0
    // Predicated region
    $region2: #{tpu_custom_call.1} parent=1 // pred_check
      _
    $region3: #{tpu_custom_call.1} parent=1 // pred_check_branch
      %15 = sbr.rel (0) target = $region5
    $region4: #{tpu_custom_call.1} parent=1 // pred_region
      _
    $region5: #{tpu_custom_call.1} parent=1 // pred_fallthru
      _
    // Predicated region
    $region6: #{tpu_custom_call.1} parent=1 // pred_check
      _
    $region7: #{tpu_custom_call.1} parent=1 // pred_check_branch
      %17 = sbr.rel (0) target = $region9
    $region8: #{tpu_custom_call.1} parent=1 // pred_region
      _
    $region9: #{tpu_custom_call.1} parent=1 // pred_fallthru
      _
    // Predicated region
    $region10: #{tpu_custom_call.1} parent=1 // pred_check
      _
    $region11: #{tpu_custom_call.1} parent=1 // pred_check_branch
      %19 = sbr.rel (0) target = $region13
    $region12: #{tpu_custom_call.1} parent=1 // pred_region
      _
    $region13: #{tpu_custom_call.1} parent=1 // pred_fallthru
      _
    // Predicated region
    $region14: #{tpu_custom_call.1} parent=1 // pred_check
      _
    $region15: #{tpu_custom_call.1} parent=1 // pred_check_branch
      %21 = sbr.rel (0) target = $region17
    $region16: #{tpu_custom_call.1} parent=1 // pred_region
      _
    $region17: #{tpu_custom_call.1} parent=1 // pred_fallthru
      _
    // Predicated region
    $region18: #{tpu_custom_call.1} parent=1 // pred_check
      _
    $region19: #{tpu_custom_call.1} parent=1 // pred_check_branch
      %23 = sbr.rel (0) target = $region21
    $region20: #{tpu_custom_call.1} parent=1 // pred_region
      _
    $region21: #{tpu_custom_call.1} parent=1 // pred_fallthru
      _
    %v25 = vld [vmem:[%s0] sm:$0xf]
    %v26 = vunpack.c.l.bf16 %v25
    %v27 = vld [vmem:[%s1] sm:$0xf]
    %v28 = vunpack.c.l.bf16 %v27
    %v29 = vlaneseq
    %v30 = vand.u32 %v29, 127
    %v31 = vadd.s32 %v30, 128
    %vm32 = vcmp.lt.s32.totalorder %v30, 0
    %v33 = vsub.s32 0, %v30
    %v34 = vsel %vm32, %v33, %v30
    %v35 = vshrl.u32 %v34, 4
    %v36 = vand.u32 %v34, 15
    %v37 = vsub.s32 0, %v36
    %v38 = vsel %vm32, %v37, %v36
    %vm39 = vcmp.lt.s32.totalorder %v31, 0
    %v40 = vsub.s32 0, %v31
    %v41 = vsel %vm39, %v40, %v31
    %v42 = vshrl.u32 %v41, 4
    %v43 = vand.u32 %v41, 15
    %v44 = vsub.s32 0, %v43
    %v45 = vsel %vm39, %v44, %v43
    %vm46 = vcmp.ne.s32.totalorder %v38, 0
    %vm47 = vcmp.ne.s32.totalorder %v45, 0
    %vm48 = vcmp.lt.s32.totalorder %v38, 0
    %vm49 = vcmp.lt.s32.totalorder %v45, 0
    %vm50 = vmand %vm48, %vm46
    %vm51 = vmand %vm49, %vm47
    %v52 = vadd.s32 %v38, 16
    %v53 = vadd.s32 %v45, 16
    %v54 = vsel %vm50, %v52, %v38
    %v55 = vsel %vm51, %v53, %v45
    %vm56 = vcmp.eq.s32.totalorder %v54, 0
    %vm57 = vcmp.eq.s32.totalorder %v55, 0
    %v59 = vcombine.high %v26, %v26
    %61 = vrot.lane.b32.xlu0 %v26, 1
    %v62 = vpop.permute.xlu0 %61
    %63 = vrot.lane.b32.xlu0 %v59, 1
    %v64 = vpop.permute.xlu0 %63
    %vm65 = vcmp.lt.s32.totalorder %v30, 1
    %v66 = vsel %vm65, %v62, %v64
    %v67 = vsel %vm65, %v64, %v62
    %v68 = vsel %vm56, 0.0, %v67
    %v69 = vsel %vm57, 0.0, %v66
    %v71 = vcombine.high %v28, %v28
    %73 = vrot.lane.b32.xlu0 %v28, 1
    %v74 = vpop.permute.xlu0 %73
    %75 = vrot.lane.b32.xlu0 %v71, 1
    %v76 = vpop.permute.xlu0 %75
    %v77 = vsel %vm65, %v74, %v76
    %v78 = vsel %vm65, %v76, %v74
    %v79 = vsel %vm56, 0.0, %v78
    %v80 = vsel %vm57, 0.0, %v77
    %vm81 = vcmp.eq.s32.totalorder %v54, 15
    %vm82 = vcmp.eq.s32.totalorder %v55, 15
    %83 = vrot.lane.b32.xlu0 %v28, 127
    %v84 = vpop.permute.xlu0 %83
    %85 = vrot.lane.b32.xlu0 %v71, 127
    %v86 = vpop.permute.xlu0 %85
    %vm87 = vcmp.lt.s32.totalorder %v30, 127
    %v88 = vsel %vm87, %v84, %v86
    %v89 = vsel %vm87, %v86, %v84
    %v90 = vsel %vm81, 0.0, %v88
    %v91 = vsel %vm82, 0.0, %v89
    %v94 = vrot.slane %v68, 4
    %v95 = vrot.slane %v69, 4
    %v100 = vrot.slane %v79, 4
    %v101 = vrot.slane %v80, 4
    %vm104 = vcmask 1043456
    %v105 = vsel %vm104, %v26, %v94
    %v106 = vsel %vm104, %v59, %v95
    %v107 = vsel %vm104, %v28, %v100
    %v108 = vsel %vm104, %v71, %v101
    %v109 = vpack.c.bf16 %v107, %v105
    %v110 = vpack.c.bf16 %v108, %v106
    %v111 = vpack.c.bf16 %v90, %v90
    %v112 = vpack.c.bf16 %v91, %v91
    %v113 = vld [vmem:[%s2] sm:$0xf]
    %v114 = vld [vmem:[%s2 + $0x4] sm:$0xf]
    %v115 = vld [vmem:[%s2 + $0x8] sm:$0xf]
    %v116 = vld [vmem:[%s2 + $0xc] sm:$0xf]
    %v117 = vld [vmem:[%s3] sm:$0xff]
    %v118 = vld [vmem:[%s3 + $0x8] sm:$0xff]
    %v119 = vld [vmem:[%s3 + $0x10] sm:$0xff]
    %v120 = vld [vmem:[%s3 + $0x18] sm:$0xff]
    %122 = vset.pattern.permute.xlu0 0
    %123 = vperm.xlu0 %122, %v117
    %v124 = vpop.permute.xlu0 %123
    %127 = vset.pattern.permute.xlu0 0
    %128 = vperm.xlu0 %127, %v118
    %v129 = vpop.permute.xlu0 %128
    %132 = vset.pattern.permute.xlu0 0
    %133 = vperm.xlu0 %132, %v119
    %v134 = vpop.permute.xlu0 %133
    %137 = vset.pattern.permute.xlu0 0
    %138 = vperm.xlu0 %137, %v120
    %v139 = vpop.permute.xlu0 %138
    %v145 = vunpack.c.l.b16 %v113
    %v146 = vunpack.c.l.b16 %v114
    %v147 = vunpack.c.l.b16 %v115
    %v148 = vunpack.c.l.b16 %v116
    %v149 = vpack.c.b16 %v146, %v145
    %v150 = vpack.c.b16 %v148, %v147
    %vm151 = vcmask 162816
    %v153 = vsel %vm151, %v149, 0
    %v156 = vsel %vm151, %v150, 0
    %vm158 = vcmask 1041408
    %v160 = vsel %vm158, %v111, 0
    %v163 = vsel %vm158, %v112, 0
    %165 = vmatprep.subr.bf16.mxu0 %v110
    %166 = vmatpush1.bf16.msra.mxu0 %v109
    %167 = vmatprep.subr.bf16.mxu0 %v163
    %168 = vmatpush1.bf16.msra.mxu0 %v160
    %169 = vmatprep.subr.bf16.mxu0 0
    %170 = vmatpush1.bf16.msra.mxu0 0
    %171 = vmatprep.subr.bf16.mxu0 0
    %172 = vmatpush1.bf16.msra.mxu0 0
    %173 = vmatprep.subr.bf16.mxu0 0
    %174 = vmatpush1.bf16.msra.mxu0 0
    %175 = vmatprep.subr.bf16.mxu0 0
    %176 = vmatpush1.bf16.msra.mxu0 0
    %177 = vmatprep.subr.bf16.mxu0 0
    %178 = vmatpush1.bf16.msra.mxu0 0
    %179 = vmatprep.subr.bf16.mxu0 0
    %180 = vmatpush1.bf16.msra.mxu0 0
    %181 = vmatprep.subr.bf16.mxu0 0
    %182 = vmatpush1.bf16.msra.mxu0 0
    %183 = vmatprep.subr.bf16.mxu0 0
    %184 = vmatpush1.bf16.msra.mxu0 0
    %185 = vmatprep.subr.bf16.mxu0 0
    %186 = vmatpush1.bf16.msra.mxu0 0
    %187 = vmatprep.subr.bf16.mxu0 0
    %188 = vmatpush1.bf16.msra.mxu0 0
    %189 = vmatprep.subr.bf16.mxu0 0
    %190 = vmatpush1.bf16.msra.mxu0 0
    %191 = vmatprep.subr.bf16.mxu0 0
    %192 = vmatpush1.bf16.msra.mxu0 0
    %193 = vmatprep.subr.bf16.mxu0 0
    %194 = vmatpush1.bf16.msra.mxu0 0
    %195 = vmatprep.subr.bf16.mxu0 0
    %196 = vmatpush1.bf16.msra.mxu0 0
    %197 = vmatprep.mubr.bf16.mxu0 0
    %198 = vmatmul.mubr.bf16.gmra.mrb[0].mxu0 %v153
    %v199 = vpop.f32.mrb[0].mxu0
    %v200 = vadd.f32 %v124, %v199
    %v201 = vpop.f32.mrb[0].mxu0
    %v202 = vadd.f32 %v124, %v201
    %v203 = vpop.f32.mrb[0].mxu0
    %v204 = vadd.f32 %v129, %v203
    %v205 = vpop.f32.mrb[0].mxu0
    %v206 = vadd.f32 %v129, %v205
    %207 = vmatprep.mubr.bf16.mxu0 0
    %208 = vmatmul.mubr.bf16.gmra.mrb[0].mxu0 %v156
    %v209 = vpop.f32.mrb[0].mxu0
    %v210 = vadd.f32 %v134, %v209
    %v211 = vpop.f32.mrb[0].mxu0
    %v212 = vadd.f32 %v134, %v211
    %v213 = vpop.f32.mrb[0].mxu0
    %v214 = vadd.f32 %v139, %v213
    %v215 = vpop.f32.mrb[0].mxu0
    %v216 = vadd.f32 %v139, %v215
    %217 = vdwg.mxu0
    %v218 = vxor.u32 %v200, 2147483648
    %v219 = vxor.u32 %v202, 2147483648
    %v220 = vxor.u32 %v204, 2147483648
    %v221 = vxor.u32 %v206, 2147483648
    %v222 = vxor.u32 %v210, 2147483648
    %v223 = vxor.u32 %v212, 2147483648
    %v224 = vxor.u32 %v214, 2147483648
    %v225 = vxor.u32 %v216, 2147483648
    %v226 = vmul.f32 %v218, 1.442695
    %v227 = vpow.pop %v226
    %v228 = vmul.f32 %v219, 1.442695
    %v229 = vpow.pop %v228
    %v230 = vmul.f32 %v220, 1.442695
    %v231 = vpow.pop %v230
    %v232 = vmul.f32 %v221, 1.442695
    %v233 = vpow.pop %v232
    %v234 = vmul.f32 %v222, 1.442695
    %v235 = vpow.pop %v234
    %v236 = vmul.f32 %v223, 1.442695
    %v237 = vpow.pop %v236
    %v238 = vmul.f32 %v224, 1.442695
    %v239 = vpow.pop %v238
    %v240 = vmul.f32 %v225, 1.442695
    %v241 = vpow.pop %v240
    %v242 = vadd.f32 %v227, 1.0
    %v243 = vadd.f32 %v229, 1.0
    %v244 = vadd.f32 %v231, 1.0
    %v245 = vadd.f32 %v233, 1.0
    %v246 = vadd.f32 %v235, 1.0
    %v247 = vadd.f32 %v237, 1.0
    %v248 = vadd.f32 %v239, 1.0
    %v249 = vadd.f32 %v241, 1.0
    %v250 = vrcp.pop %v242
    %v251 = vmul.f32 1.0, %v250
    %v252 = vrcp.pop %v243
    %v253 = vmul.f32 1.0, %v252
    %v254 = vrcp.pop %v244
    %v255 = vmul.f32 1.0, %v254
    %v256 = vrcp.pop %v245
    %v257 = vmul.f32 1.0, %v256
    %v258 = vrcp.pop %v246
    %v259 = vmul.f32 1.0, %v258
    %v260 = vrcp.pop %v247
    %v261 = vmul.f32 1.0, %v260
    %v262 = vrcp.pop %v248
    %v263 = vmul.f32 1.0, %v262
    %v264 = vrcp.pop %v249
    %v265 = vmul.f32 1.0, %v264
    %v266 = vld [vmem:[%s4] sm:$0xff]
    %v268 = vcombine.high %v266, %v266
    %v270 = vmul.f32 %v259, %v266
    %v271 = vmul.f32 %v261, %v268
    %v272 = vmul.f32 %v251, %v255
    %v273 = vmul.f32 %v253, %v257
    %v274 = vadd.f32 %v270, %v272
    %v275 = vadd.f32 %v271, %v273
    %v276 = vtanh.pop %v274
    %v277 = vtanh.pop %v275
    %v278 = vmul.f32 %v263, %v276
    %v279 = vmul.f32 %v265, %v277
    %v282 = vcombine.low %v278, %v279
    %284 = vst [vmem:[#allocation2] sm:$0xff] %v282
    %v287 = vcombine.low %v274, %v275
    %289 = vst [vmem:[#allocation4] sm:$0xff] %v287
    // Predicated region
    $region22: #{tpu_custom_call.1} parent=1 // pred_check
      _
    $region23: #{tpu_custom_call.1} parent=1 // pred_check_branch
      %291 = sbr.rel (0) target = $region25
    $region24: #{tpu_custom_call.1} parent=1 // pred_region
      %s293 = ssub.s32 128, 128
      %294 = vsyncadd [#allocation3], %s293
      %s296 = sshll.u32 [#allocation2], 4
      %s297 = int_to_ptr.vmem [resolvable:$true] %s296
      %299 = dma.vmem_to_hbm [thread:$0]  %s297, 128, %s5, [#allocation3]
    $region25: #{tpu_custom_call.1} parent=1 // pred_fallthru
      _
    // Predicated region
    $region26: #{tpu_custom_call.1} parent=1 // pred_check
      _
    $region27: #{tpu_custom_call.1} parent=1 // pred_check_branch
      %301 = sbr.rel (0) target = $region29
    $region28: #{tpu_custom_call.1} parent=1 // pred_region
      %s303 = ssub.s32 128, 128
      %304 = vsyncadd [#allocation5], %s303
      %s306 = sshll.u32 [#allocation4], 4
      %s307 = int_to_ptr.vmem [resolvable:$true] %s306
      %309 = dma.vmem_to_hbm [thread:$0]  %s307, 128, %s6, [#allocation5]
    $region29: #{tpu_custom_call.1} parent=1 // pred_fallthru
      _
    // Predicated region
    $region30: #{tpu_custom_call.1} parent=1 // pred_check
      _
    $region31: #{tpu_custom_call.1} parent=1 // pred_check_branch
      %311 = sbr.rel (0) target = $region33
    $region32: #{tpu_custom_call.1} parent=1 // pred_region
      %312 = dma.done [#allocation3], 128
    $region33: #{tpu_custom_call.1} parent=1 // pred_fallthru
      _
    // Predicated region
    $region34: #{tpu_custom_call.1} parent=1 // pred_check
      _
    $region35: #{tpu_custom_call.1} parent=1 // pred_check_branch
      %314 = sbr.rel (0) target = $region37
    $region36: #{tpu_custom_call.1} parent=1 // pred_region
      %315 = dma.done [#allocation5], 128
    $region37: #{tpu_custom_call.1} parent=1 // pred_fallthru
      _
    %316 = vsyncpa [#allocation3], 1
    %317 = vsyncpa [#allocation5], 1

</llo_original>
